<compile_context>
chip_gen: v6e
topology: v6e:2x2x1
jax: 0.10.0
libtpu: 0.0.40
codegen_flags: <defaults>
</compile_context>

<pallas_src>
import jax
import jax.numpy as jnp
from jax.experimental import pallas as pl
from jax.experimental.pallas import tpu as pltpu


def _make_corr2d_kernel(kh, kw, tile_h, w_pad, has_halo, n_acc):
    """Build a kernel specialized for a (kh, kw) filter (fully unrolled taps)."""

    def kernel(*refs):
        # has_halo:  x_ref (tile_h, w_pad), halo_ref (h_halo, w_pad),
        #            w_ref (kh*kw,), b_ref (1,), o_ref (tile_h, w_pad)
        # otherwise: x_ref, w_ref, b_ref, o_ref
        if has_halo:
            x_ref, halo_ref, w_ref, b_ref, o_ref = refs
        else:
            x_ref, w_ref, b_ref, o_ref = refs
            halo_ref = None

        # Hoist all SMEM scalar reads out of the tap loops.
        w = [w_ref[t] for t in range(kh * kw)]

        if has_halo:
            # One VMEM-resident working slab: this tile's rows + the first rows
            # of the next tile (halo).  Intra-VMEM copy, not an HBM pass.
            x = jnp.concatenate([x_ref[...], halo_ref[...]], axis=0)
        else:
            x = x_ref[...]

        # Independent accumulator chains (no f32 FMA -> a single chain would
        # serialize mul+add and under-fill the 4 VALU slots).
        accs = [None] * n_acc
        accs[0] = jnp.full((tile_h, w_pad), b_ref[0], dtype=jnp.float32)

        t = 0
        for dj in range(kw):
            # Column tap hoisted out of the row loop: one XLU lane-roll per dj.
            # Column j picks up column (j + dj); wrapped lanes only land in
            # columns >= ow, which the wrapper slices off.
            rolled = x if dj == 0 else pltpu.roll(x, w_pad - dj, axis=1)
            for di in range(kh):
                # Static sublane-offset slice (no-op when kh == 1 / no halo).
                row = rolled[di:di + tile_h, :] if has_halo else rolled
                contrib = row * w[di * kw + dj]
                idx = t % n_acc
                accs[idx] = contrib if accs[idx] is None else accs[idx] + contrib
                t += 1

        acc = accs[0]
        for extra in accs[1:]:
            if extra is not None:
                acc = acc + extra
        o_ref[...] = acc

    return kernel


def conv2d_pallas(x, weight, bias, *, tile_h=None):
    """Pallas equivalent of Conv2D.forward: corr2d(x, weight) + bias."""
    x = jnp.asarray(x, jnp.float32)
    weight = jnp.asarray(weight, jnp.float32)
    bias = jnp.asarray(bias, jnp.float32).reshape((1,))

    H, W = x.shape
    kh, kw = weight.shape
    oh, ow = H - kh + 1, W - kw + 1

    # Lane-dense padded width (multiple of 128): kernel computes / stores full
    # unmasked slabs; the wrapper slices the valid region only when needed.
    w_pad = max(128, ((W + 127) // 128) * 128)

    has_halo = kh > 1
    h_halo = (((kh - 1) + 7) // 8) * 8 if has_halo else 0

    # Generation-aware sizing.  v5e/v6e: 128 MiB physical VMEM -> bigger tiles
    # amortize per-grid-step overhead.  v7x: 64 MiB per TensorCore, 2 TCs ->
    # keep ~2 MiB buffers and guarantee >= 2 row tiles.  Unknown -> conservative.
    try:
        vmem_cap = int(pltpu.get_tpu_info().vmem_capacity_bytes)
    except Exception:  # noqa: BLE001 - fall back to conservative sizing
        vmem_cap = 0
    big_vmem = vmem_cap >= 100 * 1024 * 1024
    per_buf_budget = (4 if big_vmem else 2) * 1024 * 1024
    vmem_limit = (64 if big_vmem else 32) * 1024 * 1024

    oh_pad8 = ((oh + 7) // 8) * 8
    max_tile_rows = max(8, (per_buf_budget // (4 * w_pad)) // 8 * 8)
    if tile_h is None:
        tile_h = min(oh_pad8, 2048, max_tile_rows)
        if not big_vmem and oh_pad8 > 8:
            # v7x (or unknown): ensure at least two row tiles so the "parallel"
            # grid axis actually gives both TensorCores work.
            tile_h = min(tile_h, max(8, ((oh_pad8 // 2) // 8) * 8))
    else:
        tile_h = max(8, (min(tile_h, oh_pad8) // 8) * 8)
    if has_halo and h_halo > 8:
        # The halo block start ((i+1)*tile_h) must be a multiple of h_halo.
        tile_h = max(h_halo, (tile_h // h_halo) * h_halo)

    n_tiles = (oh + tile_h - 1) // tile_h
    oh_pad = n_tiles * tile_h
    rows_needed = oh_pad + h_halo          # main blocks + trailing halo block

    # Single fused zero-pad, and only when the natural shape isn't already
    # aligned (no extra HBM pass in the aligned case).
    if rows_needed != H or w_pad != W:
        x_p = jnp.pad(x, ((0, rows_needed - H), (0, w_pad - W)))
    else:
        x_p = x

    in_specs = [pl.BlockSpec((tile_h, w_pad), lambda i: (i, 0))]
    inputs = [x_p]
    if has_halo:
        hb = tile_h // h_halo
        # Halo rows come straight from the flat input via a second small
        # blocked view of the SAME array (replaces the old overlapped gather).
        in_specs.append(
            pl.BlockSpec((h_halo, w_pad), lambda i, hb=hb: ((i + 1) * hb, 0)))
        inputs.append(x_p)
    in_specs += [
        pl.BlockSpec(memory_space=pltpu.MemorySpace.SMEM),   # flattened weight
        pl.BlockSpec(memory_space=pltpu.MemorySpace.SMEM),   # bias
    ]
    inputs += [weight.reshape(-1), bias]

    n_acc = min(4, kh * kw)

    out = pl.pallas_call(
        _make_corr2d_kernel(kh, kw, tile_h, w_pad, has_halo, n_acc),
        out_shape=jax.ShapeDtypeStruct((oh_pad, w_pad), jnp.float32),
        grid_spec=pltpu.PrefetchScalarGridSpec(
            num_scalar_prefetch=0,
            grid=(n_tiles,),
            in_specs=in_specs,
            out_specs=pl.BlockSpec((tile_h, w_pad), lambda i: (i, 0)),
        ),
        compiler_params=pltpu.CompilerParams(
            dimension_semantics=("parallel",),    # v7x: split tiles over 2 TCs
            vmem_limit_bytes=vmem_limit,
        ),
    )(*inputs)

    # Slice only when padding was added (skip the extra HBM pass otherwise).
    if oh_pad != oh or w_pad != ow:
        out = out[:oh, :ow]
    return out


def corr2d_ref(x, k):
    """Pure-JAX reference identical to the PyTorch corr2d loop."""
    kh, kw = k.shape
    oh, ow = x.shape[0] - kh + 1, x.shape[1] - kw + 1
    out = jnp.zeros((oh, ow), jnp.float32)
    for di in range(kh):
        for dj in range(kw):
            out = out + x[di:di + oh, dj:dj + ow] * k[di, dj]
    return out


if __name__ == "__main__":
    key = jax.random.PRNGKey(0)
    k_x, k_w, k_b = jax.random.split(key, 3)

    # Shapes consistent with the module: X is 6x8, kernel_size = (1, 2).
    H, W = 6, 8
    kernel_size = (1, 2)

    x = jax.random.normal(k_x, (H, W), dtype=jnp.float32)
    weight = jax.random.normal(k_w, kernel_size, dtype=jnp.float32)
    bias = jax.random.normal(k_b, (1,), dtype=jnp.float32)

    y = conv2d_pallas(x, weight, bias)
    jax.block_until_ready(y)

    y_ref = corr2d_ref(x, weight) + bias[0]
    assert y.shape == (H - kernel_size[0] + 1, W - kernel_size[1] + 1)
    assert jnp.allclose(y, y_ref, atol=1e-5, rtol=1e-5)

    # Canonical example from the spec: X = ones(6, 8), K = [[1, -1]], bias = 0.
    X1 = jnp.ones((6, 8), jnp.float32)
    K1 = jnp.array([[1.0, -1.0]], jnp.float32)
    y1 = conv2d_pallas(X1, K1, jnp.zeros((1,), jnp.float32))
    assert jnp.allclose(y1, corr2d_ref(X1, K1), atol=1e-6)

    # kh > 1, kw == 1: exercises the halo path with no column rolls and an
    # already lane-aligned width (no column padding / slicing needed).
    k3x, k3w, k3b = jax.random.split(jax.random.PRNGKey(2), 3)
    x3 = jax.random.normal(k3x, (16, 128), dtype=jnp.float32)
    w3 = jax.random.normal(k3w, (3, 1), dtype=jnp.float32)
    b3 = jax.random.normal(k3b, (1,), dtype=jnp.float32)
    y3 = conv2d_pallas(x3, w3, b3)
    jax.block_until_ready(y3)
    assert jnp.allclose(y3, corr2d_ref(x3, w3) + b3[0], atol=1e-4, rtol=1e-5)

    # Larger case exercising multi-tile grid, row halos and multi-column taps.
    k2x, k2w, k2b = jax.random.split(jax.random.PRNGKey(1), 3)
    x2 = jax.random.normal(k2x, (300, 200), dtype=jnp.float32)
    w2 = jax.random.normal(k2w, (3, 3), dtype=jnp.float32)
    b2 = jax.random.normal(k2b, (1,), dtype=jnp.float32)
    y2 = conv2d_pallas(x2, w2, b2, tile_h=128)
    jax.block_until_ready(y2)
    y2_ref = corr2d_ref(x2, w2) + b2[0]
    assert y2.shape == (298, 198)
    assert jnp.allclose(y2, y2_ref, atol=1e-4, rtol=1e-5)

    print("KERNEL_OK")
</pallas_src>

<mosaic_0001>
module attributes {stable_mosaic.version = 11 : i64} {
  func.func @kernel(%arg0: i32, %arg1: memref<8x128xf32, #tpu.memory_space<vmem>>, %arg2: memref<2xf32, #tpu.memory_space<smem>>, %arg3: memref<1xf32, #tpu.memory_space<smem>>, %arg4: memref<8x128xf32, #tpu.memory_space<vmem>>) attributes {dimension_semantics = [#tpu.dimension_semantics<parallel>], iteration_bounds = array<i64: 1>, scalar_prefetch = 0 : i64, scratch_operands = 0 : i64, tpu.core_type = #tpu.core_type<tc>, window_params = [{transform_indices = @transform_0, window_bounds = array<i64: 8, 128>}, {transform_indices = @transform_1, window_bounds = array<i64: 2>}, {transform_indices = @transform_2, window_bounds = array<i64: 1>}, {transform_indices = @transform_3, window_bounds = array<i64: 8, 128>}]} {
    %c0 = arith.constant 0 : index
    %0 = memref.load %arg2[%c0] : memref<2xf32, #tpu.memory_space<smem>>
    %c1 = arith.constant 1 : index
    %1 = memref.load %arg2[%c1] : memref<2xf32, #tpu.memory_space<smem>>
    %c0_0 = arith.constant 0 : index
    %c0_1 = arith.constant 0 : index
    %2 = vector.load %arg1[%c0_0, %c0_1] : memref<8x128xf32, #tpu.memory_space<vmem>>, vector<8x128xf32>
    %c0_2 = arith.constant 0 : index
    %3 = memref.load %arg3[%c0_2] : memref<1xf32, #tpu.memory_space<smem>>
    %4 = vector.broadcast %3 : f32 to vector<8x128xf32>
    %5 = vector.broadcast %0 : f32 to vector<8x128xf32>
    %6 = arith.mulf %2, %5 : vector<8x128xf32>
    %7 = arith.addf %4, %6 : vector<8x128xf32>
    %c127_i32 = arith.constant 127 : i32
    %8 = tpu.dynamic_rotate %2 by %c127_i32 dim 1 : vector<8x128xf32>, i32 -> vector<8x128xf32>
    %9 = vector.broadcast %1 : f32 to vector<8x128xf32>
    %10 = arith.mulf %8, %9 : vector<8x128xf32>
    %11 = arith.addf %7, %10 : vector<8x128xf32>
    %c0_3 = arith.constant 0 : index
    %c0_4 = arith.constant 0 : index
    %12 = vector.load %arg4[%c0_3, %c0_4] : memref<8x128xf32, #tpu.memory_space<vmem>>, vector<8x128xf32>
    tpu.vector_store %arg4[%c0_3, %c0_4], %11 {strides = array<i32>} : memref<8x128xf32, #tpu.memory_space<vmem>>, vector<8x128xf32>,
    return
  }
  func.func @transform_0(%arg0: i32) -> (i32, i32) {
    %c0_i32 = arith.constant 0 : i32
    %c0_i32_0 = arith.constant 0 : i32
    return %arg0, %c0_i32 : i32, i32
  }
  func.func @transform_1(%arg0: i32) -> i32 {
    %c0_i32 = arith.constant 0 : i32
    %c0_i32_0 = arith.constant 0 : i32
    return %c0_i32 : i32
  }
  func.func @transform_2(%arg0: i32) -> i32 {
    %c0_i32 = arith.constant 0 : i32
    %c0_i32_0 = arith.constant 0 : i32
    return %c0_i32 : i32
  }
  func.func @transform_3(%arg0: i32) -> (i32, i32) {
    %c0_i32 = arith.constant 0 : i32
    %c0_i32_0 = arith.constant 0 : i32
    return %arg0, %c0_i32 : i32, i32
  }
}

</mosaic_0001>

<llo_original>
// kernel: tpu_custom_call.1
$region0: #{tpu_custom_call.1}
  #allocation0 [shape = 'u32[]', space=smem, size = 0x4, offset = 0x4, fixed_abs, tag = 'smem constant byte address 0x4 - core index']
  #allocation1 [shape = 'u32[144,128]{1,0:T(1,128)}', space=vmem, size = 0x12000, scoped, tag = 'internal scratch']
  #allocation2 [shape = 'f32[1]{0:T(128)S(6)}', space=smem, size = 0x200, scoped, tag = 'scoped memory for tpu_custom_call.1']
  %s0 = inlined_call_operand.hbm [shape: f32[8,128], index: 0, kind: input, shape index: {}]
  %s1 = inlined_call_operand.vmem [shape: f32[2], index: 1, kind: input, shape index: {}]
  %s2 = inlined_call_operand.<no memory space> [shape: f32[1], index: 2, kind: input, shape index: {}]
  %s3 = inlined_call_operand.hbm [shape: f32[8,128], index: 3, kind: output, shape index: {}]
  %s4 = sld [smem:[#allocation0]]
  $region30: #{tpu_custom_call.1} parent=0
    _
  %s6 = ssub.s32 1, %s4
  %s7 = scalar_select 0, %s6, %s4
  %8 = sst [smem:[#allocation2]] %s2
  $region1: #{tpu_custom_call.1} parent=0
    #allocation3 [shape = 'u8[4096]{0}', space=vmem, size = 0x1000, scoped, tag = 'input window, operand 0, single buffered']
    #allocation4 [shape = 's32[1]{0}', space=sflag, size = 0x4, scoped, tag = 'scoped memory for tpu_custom_call.1']
    #allocation5 [shape = 's32[1]{0}', space=sflag, size = 0x4, scoped, tag = 'scoped memory for tpu_custom_call.1']
    #allocation6 [shape = 's32[1]{0}', space=sflag, size = 0x4, scoped, tag = 'scoped memory for tpu_custom_call.1']
    #allocation7 [shape = 'u8[512]{0}', space=smem, size = 0x200, scoped, tag = 'input window, operand 1, single buffered']
    #allocation8 [shape = 'u8[4096]{0}', space=vmem, size = 0x1000, scoped, tag = 'output window, operand 0, single buffered']
    %9 = vsyncpa [#allocation4], 0
    %10 = vsyncpa [#allocation6], 0
    %11 = vsyncpa [#allocation5], 0
    // Predicated region
    $region2: #{tpu_custom_call.1} parent=1 // pred_check
      _
    $region3: #{tpu_custom_call.1} parent=1 // pred_check_branch
      %13 = sbr.rel (0) target = $region5
    $region4: #{tpu_custom_call.1} parent=1 // pred_region
      %s15 = ssub.s32 128, 128
      %16 = vsyncadd [#allocation4], %s15
      %s18 = sshll.u32 [#allocation3], 4
      %s19 = int_to_ptr.vmem [resolvable:$true] %s18
      %21 = dma.hbm_to_vmem [thread:$0]  %s0, 128, %s19, [#allocation4]
    $region5: #{tpu_custom_call.1} parent=1 // pred_fallthru
      _
    // Predicated region
    $region6: #{tpu_custom_call.1} parent=1 // pred_check
      _
    $region7: #{tpu_custom_call.1} parent=1 // pred_check_branch
      %23 = sbr.rel (0) target = $region9
    $region8: #{tpu_custom_call.1} parent=1 // pred_region
      %s25 = ssub.s32 16, 16
      %26 = vsyncadd [#allocation6], %s25
      %s28 = sshll.u32 %s1, 4
      %s29 = int_to_ptr.vmem [resolvable:$true] %s28
      %31 = dma.vmem_to_smem %s29, 16, [#allocation7], [#allocation6]
    $region9: #{tpu_custom_call.1} parent=1 // pred_fallthru
      _
    // Predicated region
    $region10: #{tpu_custom_call.1} parent=1 // pred_check
      _
    $region11: #{tpu_custom_call.1} parent=1 // pred_check_branch
      %33 = sbr.rel (0) target = $region13
    $region12: #{tpu_custom_call.1} parent=1 // pred_region
      _
    $region13: #{tpu_custom_call.1} parent=1 // pred_fallthru
      _
    // Predicated region
    $region14: #{tpu_custom_call.1} parent=1 // pred_check
      _
    $region15: #{tpu_custom_call.1} parent=1 // pred_check_branch
      %35 = sbr.rel (0) target = $region17
    $region16: #{tpu_custom_call.1} parent=1 // pred_region
      %36 = dma.done [#allocation4], 128
    $region17: #{tpu_custom_call.1} parent=1 // pred_fallthru
      _
    // Predicated region
    $region18: #{tpu_custom_call.1} parent=1 // pred_check
      _
    $region19: #{tpu_custom_call.1} parent=1 // pred_check_branch
      %38 = sbr.rel (0) target = $region21
    $region20: #{tpu_custom_call.1} parent=1 // pred_region
      %39 = dma.done [#allocation6], 16
    $region21: #{tpu_custom_call.1} parent=1 // pred_fallthru
      _
    %40 = sfence
    %s41 = sld [smem:[#allocation7]]
    %s42 = sld [smem:[#allocation7 + $0x1]]
    %v43 = vld [vmem:[#allocation3] sm:$0xff]
    %s44 = sld [smem:[#allocation2]]
    %v45 = vstv %s44
    %v46 = vstv %s41
    %v47 = vmul.f32 %v43, %v46
    %v48 = vadd.f32 %v45, %v47
    %49 = vrot.lane.b32.xlu0 %v43, 127
    %v50 = vpop.permute.xlu0 %49
    %v51 = vstv %s42
    %v52 = vmul.f32 %v50, %v51
    %v53 = vadd.f32 %v48, %v52
    %54 = vst [vmem:[#allocation8] sm:$0xff] %v53
    // Predicated region
    $region22: #{tpu_custom_call.1} parent=1 // pred_check
      _
    $region23: #{tpu_custom_call.1} parent=1 // pred_check_branch
      %56 = sbr.rel (0) target = $region25
    $region24: #{tpu_custom_call.1} parent=1 // pred_region
      %s58 = ssub.s32 128, 128
      %59 = vsyncadd [#allocation5], %s58
      %s61 = sshll.u32 [#allocation8], 4
      %s62 = int_to_ptr.vmem [resolvable:$true] %s61
      %64 = dma.vmem_to_hbm [thread:$0]  %s62, 128, %s3, [#allocation5]
    $region25: #{tpu_custom_call.1} parent=1 // pred_fallthru
      _
    // Predicated region
    $region26: #{tpu_custom_call.1} parent=1 // pred_check
      _
    $region27: #{tpu_custom_call.1} parent=1 // pred_check_branch
      %66 = sbr.rel (0) target = $region29
    $region28: #{tpu_custom_call.1} parent=1 // pred_region
      %67 = dma.done [#allocation5], 128
    $region29: #{tpu_custom_call.1} parent=1 // pred_fallthru
      _
    %68 = vsyncpa [#allocation4], 1
    %69 = vsyncpa [#allocation5], 1
    %70 = vsyncpa [#allocation6], 1

</llo_original>
